<compile_context>
chip_gen: v7x
topology: tpu7x:2x2x1
jax: 0.10.0
libtpu: 0.0.40
codegen_flags: <defaults>
</compile_context>

<pallas_src>
import functools

import jax
import jax.numpy as jnp
from jax import lax
from jax.experimental import pallas as pl
from jax.experimental.pallas import tpu as pltpu

_HALO = 8          # halo rows per side of an L-tile (multiple of 8 keeps slices aligned)
_LANE = 128        # TPU lane width; channel dim is padded to a multiple of this
_EPS = 1e-5


def _round_up(a, b):
    return (a + b - 1) // b * b


def _bottleneck_kernel(x_hbm, w1_ref, b1_ref, w2_ref, b2_ref, o_ref,
                       xwin, sem, *, l_tile, seq_len, num_l, compute_dtype, shortcut):
    """Grid = (batch, L-tile). Computes one (l_tile, C) output tile.

    x_hbm : (N, Lp + 2*HALO, C) f32 in HBM (pl.ANY) - zero padded in L and C
    wX_ref: (3*C, C) compute_dtype - tap-stacked conv weights, BN scale folded in
    bX_ref: (1, C)   f32           - folded BN bias
    o_ref : (1, l_tile, C) f32 output tile
    xwin  : (2, l_tile + 2*HALO, C) f32 VMEM scratch (manual double buffer)
    sem   : (2,) DMA semaphores
    """
    b = pl.program_id(0)
    l = pl.program_id(1)
    rows = l_tile + 2 * _HALO
    slot = l % 2

    def fetch(l_idx, s):
        return pltpu.make_async_copy(
            x_hbm.at[b, pl.ds(l_idx * l_tile, rows), :], xwin.at[s], sem.at[s])

    # First L-tile of this batch row: nothing was prefetched for us -> fetch now.
    @pl.when(l == 0)
    def _():
        fetch(0, 0).start()

    # Wait for this tile's window (started just above, or by the previous L-step).
    fetch(l, slot).wait()

    # Prefetch the next L-tile of this batch row; hidden behind the matmuls below.
    # (L axis is "arbitrary" so steps along l run in order on one core.)
    @pl.when(l + 1 < num_l)
    def _():
        fetch(l + 1, 1 - slot).start()

    win = xwin[slot]                                    # (rows, C) f32
    t0 = l * l_tile                                     # first output row (global index)

    def conv3(src, ofs, n_rows, w_ref, b_ref):
        # Output row r uses src rows (ofs+r-1, ofs+r, ofs+r+1): lane-stack the three
        # shifted views and do ONE (n_rows, 3C) @ (3C, C) MXU matmul, f32 accumulate.
        taps = jnp.concatenate(
            [src[ofs - 1 + k: ofs - 1 + k + n_rows, :].astype(compute_dtype)
             for k in range(3)], axis=-1)               # (n_rows, 3C)
        y = jnp.dot(taps, w_ref[...], preferred_element_type=jnp.float32)
        y = y + b_ref[...]                              # folded BatchNorm bias (f32)
        return y * jax.nn.sigmoid(y)                    # SiLU (f32)

    # cv1 on global rows [t0-1, t0+l_tile+1): one extra row per side feeds cv2's taps.
    h = conv3(win, _HALO - 1, l_tile + 2, w1_ref, b1_ref)        # (l_tile+2, C)
    # cv2's "same" padding is zero *in h-space*: zero rows outside [0, seq_len).
    g = t0 - 1 + lax.broadcasted_iota(jnp.int32, (l_tile + 2, 1), 0)
    h = jnp.where((g >= 0) & (g < seq_len), h, 0.0)

    # cv2 on global rows [t0, t0+l_tile)
    y = conv3(h, 1, l_tile, w2_ref, b2_ref)                       # (l_tile, C)

    if shortcut:
        y = y + win[_HALO:_HALO + l_tile, :]            # residual in f32 (aligned slice)
    o_ref[0] = y.astype(o_ref.dtype)


def _fold_conv_bn(w, bn, c_pad, compute_dtype, eps=_EPS):
    """PyTorch Conv1d weight (c_out, c_in, 3) + BatchNorm1d (eval) ->
    tap-stacked (3*c_pad, c_pad) weight with BN scale folded in, and (1, c_pad) f32 bias."""
    gamma, beta, mean, var = (jnp.asarray(t, jnp.float32) for t in bn)
    w = jnp.asarray(w, jnp.float32)
    c_out, c_in, k = w.shape
    assert k == 3, "kernel is specialized for k=3"
    scale = gamma * lax.rsqrt(var + eps)                          # (c_out,)
    bias = beta - mean * scale                                    # (c_out,)
    w_taps = jnp.transpose(w, (2, 1, 0)) * scale[None, None, :]   # (3, c_in, c_out)
    w_taps = jnp.pad(w_taps, ((0, 0), (0, c_pad - c_in), (0, c_pad - c_out)))
    w_stacked = w_taps.reshape(3 * c_pad, c_pad).astype(compute_dtype)
    bias = jnp.pad(bias, (0, c_pad - c_out))[None, :]             # (1, c_pad) f32
    return w_stacked, bias


def bottleneck_pallas_nlc(x_nlc, w1, bn1, w2, bn2, *, shortcut=True,
                          l_tile=512, compute_dtype=jnp.bfloat16):
    """x_nlc: (N, L, C) float32, channels-last (TPU-native layout). Returns (N, L, C)."""
    N, L, C = x_nlc.shape
    c_pad = _round_up(max(C, _LANE), _LANE)               # lane-dense channels
    lt = _round_up(min(l_tile, _round_up(L, 8)), 8)       # L tile, multiple of 8
    l_pad = _round_up(L, lt)
    num_l = l_pad // lt

    # Zero pad: HALO rows front/back (conv "same" padding + tile halo) and channels.
    x_pad = jnp.pad(x_nlc.astype(jnp.float32),
                    ((0, 0), (_HALO, _HALO + l_pad - L), (0, c_pad - C)))
    w1s, b1 = _fold_conv_bn(w1, bn1, c_pad, compute_dtype)
    w2s, b2 = _fold_conv_bn(w2, bn2, c_pad, compute_dtype)

    kernel = functools.partial(
        _bottleneck_kernel, l_tile=lt, seq_len=L, num_l=num_l,
        compute_dtype=compute_dtype, shortcut=shortcut)

    flops = 2 * 2 * N * l_pad * (3 * c_pad) * c_pad       # two k=3 convs
    bytes_accessed = int((x_pad.size + N * l_pad * c_pad) * 4
                         + (w1s.size + w2s.size) * w1s.dtype.itemsize)
    cost = pl.CostEstimate(flops=flops,
                           transcendentals=2 * N * l_pad * c_pad,
                           bytes_accessed=bytes_accessed)

    out = pl.pallas_call(
        kernel,
        out_shape=jax.ShapeDtypeStruct((N, l_pad, c_pad), jnp.float32),
        grid_spec=pltpu.PrefetchScalarGridSpec(
            num_scalar_prefetch=0,
            grid=(N, num_l),
            in_specs=[
                pl.BlockSpec(memory_space=pl.ANY),                      # x (HBM, manual DMA)
                pl.BlockSpec((3 * c_pad, c_pad), lambda b, l: (0, 0)),  # w1 (stacked, folded)
                pl.BlockSpec((1, c_pad), lambda b, l: (0, 0)),          # b1
                pl.BlockSpec((3 * c_pad, c_pad), lambda b, l: (0, 0)),  # w2
                pl.BlockSpec((1, c_pad), lambda b, l: (0, 0)),          # b2
            ],
            out_specs=pl.BlockSpec((1, lt, c_pad), lambda b, l: (b, l, 0)),
            scratch_shapes=[
                pltpu.VMEM((2, lt + 2 * _HALO, c_pad), jnp.float32),    # x window dbl-buffer
                pltpu.SemaphoreType.DMA((2,)),
            ],
        ),
        compiler_params=pltpu.CompilerParams(
            # Batch is parallel (megacore); L axis is sequential so the manual window
            # prefetch of tile l+1 can legally overlap the compute of tile l.
            dimension_semantics=("parallel", "arbitrary"),
            vmem_limit_bytes=48 * 1024 * 1024,
        ),
        cost_estimate=cost,
    )(x_pad, w1s, b1, w2s, b2)

    return out[:, :L, :C]


def bottleneck_pallas(x_ncl, w1, bn1, w2, bn2, **kwargs):
    """PyTorch-layout adapter: x (N, C, L) -> (N, C, L).

    The transposes below are test-harness glue only; inside a full network keep the
    activations in NLC and call bottleneck_pallas_nlc directly (saves two HBM
    round trips per block)."""
    x_nlc = jnp.transpose(x_ncl, (0, 2, 1))
    out = bottleneck_pallas_nlc(x_nlc, w1, bn1, w2, bn2, **kwargs)
    return jnp.transpose(out, (0, 2, 1))


# ---------------- pure-JAX reference (no torch) ----------------
def _ref_conv_bn_silu(x_ncl, w, bn, eps=_EPS):
    gamma, beta, mean, var = bn
    y = lax.conv_general_dilated(
        x_ncl, w, window_strides=(1,), padding=[(1, 1)],
        dimension_numbers=("NCH", "OIH", "NCH"))
    y = (y - mean[None, :, None]) * lax.rsqrt(var[None, :, None] + eps)
    y = y * gamma[None, :, None] + beta[None, :, None]
    return y * jax.nn.sigmoid(y)


def bottleneck_ref(x_ncl, w1, bn1, w2, bn2, shortcut=True):
    h = _ref_conv_bn_silu(x_ncl, w1, bn1)
    y = _ref_conv_bn_silu(h, w2, bn2)
    return x_ncl + y if shortcut else y


if __name__ == "__main__":
    key = jax.random.PRNGKey(0)
    N, C, L = 2, 8, 16                 # Bottleneck(c1=c2=8, e=1) -> shortcut active
    ks = jax.random.split(key, 11)

    x = jax.random.normal(ks[0], (N, C, L), jnp.float32)
    w1 = 0.1 * jax.random.normal(ks[1], (C, C, 3), jnp.float32)
    w2 = 0.1 * jax.random.normal(ks[2], (C, C, 3), jnp.float32)
    bn1 = (jax.random.uniform(ks[3], (C,), jnp.float32, 0.5, 1.5),   # gamma
           0.1 * jax.random.normal(ks[4], (C,), jnp.float32),        # beta
           0.1 * jax.random.normal(ks[5], (C,), jnp.float32),        # running_mean
           jax.random.uniform(ks[6], (C,), jnp.float32, 0.5, 1.5))   # running_var
    bn2 = (jax.random.uniform(ks[7], (C,), jnp.float32, 0.5, 1.5),
           0.1 * jax.random.normal(ks[8], (C,), jnp.float32),
           0.1 * jax.random.normal(ks[9], (C,), jnp.float32),
           jax.random.uniform(ks[10], (C,), jnp.float32, 0.5, 1.5))

    ref = bottleneck_ref(x, w1, bn1, w2, bn2)

    # f32 MXU path, l_tile=8 -> 2 L-tiles per batch row (exercises halo + prefetch).
    out_f32 = jax.block_until_ready(
        bottleneck_pallas(x, w1, bn1, w2, bn2, l_tile=8, compute_dtype=jnp.float32))
    assert out_f32.shape == (N, C, L)
    assert jnp.allclose(out_f32, ref, atol=2e-3, rtol=2e-3), "f32 path mismatch vs reference"

    # bf16 MXU path (production default): matmul inputs rounded to bf16.
    out_bf16 = jax.block_until_ready(
        bottleneck_pallas(x, w1, bn1, w2, bn2, l_tile=8, compute_dtype=jnp.bfloat16))
    assert jnp.allclose(out_bf16, ref, atol=3e-2, rtol=3e-2), "bf16 path mismatch vs reference"

    # L not divisible by the tile (exercises the masked tail tile).
    L2 = 20
    x2 = jax.random.normal(jax.random.PRNGKey(1), (1, C, L2), jnp.float32)
    ref2 = bottleneck_ref(x2, w1, bn1, w2, bn2)
    out2 = jax.block_until_ready(
        bottleneck_pallas(x2, w1, bn1, w2, bn2, l_tile=8, compute_dtype=jnp.float32))
    assert jnp.allclose(out2, ref2, atol=2e-3, rtol=2e-3), "ragged-L mismatch vs reference"

    print("KERNEL_OK")
</pallas_src>

<mosaic_0001>
module attributes {stable_mosaic.version = 11 : i64} {
  func.func @_bottleneck_kernel(%arg0: i32, %arg1: i32, %arg2: memref<2x32x128xf32, #tpu.memory_space<any>>, %arg3: memref<384x128xf32, #tpu.memory_space<vmem>>, %arg4: memref<1x128xf32, #tpu.memory_space<vmem>>, %arg5: memref<384x128xf32, #tpu.memory_space<vmem>>, %arg6: memref<1x128xf32, #tpu.memory_space<vmem>>, %arg7: memref<1x8x128xf32, #tpu.memory_space<vmem>>, %arg8: memref<2x24x128xf32, #tpu.memory_space<vmem>>, %arg9: memref<2x!tpu.dma_semaphore, #tpu.memory_space<semaphore_mem>>) attributes {dimension_semantics = [#tpu.dimension_semantics<parallel>, #tpu.dimension_semantics<arbitrary>], iteration_bounds = array<i64: 2, 2>, scalar_prefetch = 0 : i64, scratch_operands = 2 : i64, tpu.core_type = #tpu.core_type<tc>, window_params = [{}, {pipeline_mode = #tpu.pipeline_mode<synchronous>, transform_indices = @transform_1, window_bounds = array<i64: 384, 128>}, {pipeline_mode = #tpu.pipeline_mode<synchronous>, transform_indices = @transform_2, window_bounds = array<i64: 1, 128>}, {pipeline_mode = #tpu.pipeline_mode<synchronous>, transform_indices = @transform_3, window_bounds = array<i64: 384, 128>}, {pipeline_mode = #tpu.pipeline_mode<synchronous>, transform_indices = @transform_4, window_bounds = array<i64: 1, 128>}, {transform_indices = @transform_5, window_bounds = array<i64: 1, 8, 128>}]} {
    %c2_i32 = arith.constant 2 : i32
    %c0_i32 = arith.constant 0 : i32
    %0 = arith.cmpi eq, %c2_i32, %c0_i32 : i32
    %c1_i32 = arith.constant 1 : i32
    %1 = arith.select %0, %c1_i32, %c2_i32 : i32
    %2 = arith.remsi %arg1, %1 : i32
    %c0_i32_0 = arith.constant 0 : i32
    %3 = arith.cmpi ne, %2, %c0_i32_0 : i32
    %c0_i32_1 = arith.constant 0 : i32
    %4 = arith.cmpi slt, %2, %c0_i32_1 : i32
    %c0_i32_2 = arith.constant 0 : i32
    %5 = arith.cmpi slt, %1, %c0_i32_2 : i32
    %6 = arith.xori %4, %5 : i1
    %7 = arith.andi %6, %3 : i1
    %8 = arith.addi %2, %1 : i32
    %9 = arith.select %7, %8, %2 : i32
    %c0_i32_3 = arith.constant 0 : i32
    %10 = arith.cmpi eq, %arg1, %c0_i32_3 : i32
    %11 = arith.extui %10 : i1 to i32
    %c0_i32_4 = arith.constant 0 : i32
    %12 = arith.cmpi ne, %11, %c0_i32_4 : i32
    scf.if %12 {
      %c0_i32_30 = arith.constant 0 : i32
      %c0_i32_31 = arith.constant 0 : i32
      %c0_i32_32 = arith.constant 0 : i32
      %c0_i32_33 = arith.constant 0 : i32
      %76 = tpu.memref_slice %arg2[%arg0, %c0_i32_32, %c0_i32_33] : memref<2x32x128xf32, #tpu.memory_space<any>> -> memref<1x24x128xf32, #tpu.memory_space<any>>
      %77 = tpu.memref_squeeze %76 : memref<1x24x128xf32, #tpu.memory_space<any>> -> memref<24x128xf32, #tpu.memory_space<any>>
      %c0_i32_34 = arith.constant 0 : i32
      %c0_i32_35 = arith.constant 0 : i32
      %78 = tpu.memref_slice %arg8[%c0_i32_30, %c0_i32_34, %c0_i32_35] : memref<2x24x128xf32, #tpu.memory_space<vmem>> -> memref<1x24x128xf32, #tpu.memory_space<vmem>>
      %79 = tpu.memref_squeeze %78 : memref<1x24x128xf32, #tpu.memory_space<vmem>> -> memref<24x128xf32, #tpu.memory_space<vmem>>
      %80 = tpu.memref_slice %arg9[%c0_i32_31] : memref<2x!tpu.dma_semaphore, #tpu.memory_space<semaphore_mem>> -> memref<1x!tpu.dma_semaphore, #tpu.memory_space<semaphore_mem>>
      %81 = tpu.memref_squeeze %80 : memref<1x!tpu.dma_semaphore, #tpu.memory_space<semaphore_mem>> -> memref<!tpu.dma_semaphore, #tpu.memory_space<semaphore_mem>>
      tpu.enqueue_dma source(%77 : memref<24x128xf32, #tpu.memory_space<any>>) target(%79 : memref<24x128xf32, #tpu.memory_space<vmem>>) target_semaphore(%81 : memref<!tpu.dma_semaphore, #tpu.memory_space<semaphore_mem>>)
    } else {
    }
    %c8_i32 = arith.constant 8 : i32
    %13 = arith.muli %arg1, %c8_i32 : i32
    %c0_i32_5 = arith.constant 0 : i32
    %14 = tpu.memref_slice %arg2[%arg0, %13, %c0_i32_5] : memref<2x32x128xf32, #tpu.memory_space<any>> -> memref<1x24x128xf32, #tpu.memory_space<any>>
    %15 = tpu.memref_squeeze %14 : memref<1x24x128xf32, #tpu.memory_space<any>> -> memref<24x128xf32, #tpu.memory_space<any>>
    %c0_i32_6 = arith.constant 0 : i32
    %c0_i32_7 = arith.constant 0 : i32
    %16 = tpu.memref_slice %arg8[%9, %c0_i32_6, %c0_i32_7] : memref<2x24x128xf32, #tpu.memory_space<vmem>> -> memref<1x24x128xf32, #tpu.memory_space<vmem>>
    %17 = tpu.memref_squeeze %16 : memref<1x24x128xf32, #tpu.memory_space<vmem>> -> memref<24x128xf32, #tpu.memory_space<vmem>>
    %18 = tpu.memref_slice %arg9[%9] : memref<2x!tpu.dma_semaphore, #tpu.memory_space<semaphore_mem>> -> memref<1x!tpu.dma_semaphore, #tpu.memory_space<semaphore_mem>>
    %19 = tpu.memref_squeeze %18 : memref<1x!tpu.dma_semaphore, #tpu.memory_space<semaphore_mem>> -> memref<!tpu.dma_semaphore, #tpu.memory_space<semaphore_mem>>
    tpu.wait_dma2 semaphore(%19 : memref<!tpu.dma_semaphore, #tpu.memory_space<semaphore_mem>>) src(%15 : memref<24x128xf32, #tpu.memory_space<any>>) dst(%17 : memref<24x128xf32, #tpu.memory_space<vmem>>)
    %c1_i32_8 = arith.constant 1 : i32
    %20 = arith.addi %arg1, %c1_i32_8 : i32
    %c2_i32_9 = arith.constant 2 : i32
    %21 = arith.cmpi slt, %20, %c2_i32_9 : i32
    %22 = arith.extui %21 : i1 to i32
    %c0_i32_10 = arith.constant 0 : i32
    %23 = arith.cmpi ne, %22, %c0_i32_10 : i32
    scf.if %23 {
      %c1_i32_30 = arith.constant 1 : i32
      %76 = arith.addi %arg1, %c1_i32_30 : i32
      %c1_i32_31 = arith.constant 1 : i32
      %77 = arith.subi %c1_i32_31, %9 : i32
      %c8_i32_32 = arith.constant 8 : i32
      %78 = arith.muli %76, %c8_i32_32 : i32
      %c0_i32_33 = arith.constant 0 : i32
      %79 = tpu.memref_slice %arg2[%arg0, %78, %c0_i32_33] : memref<2x32x128xf32, #tpu.memory_space<any>> -> memref<1x24x128xf32, #tpu.memory_space<any>>
      %80 = tpu.memref_squeeze %79 : memref<1x24x128xf32, #tpu.memory_space<any>> -> memref<24x128xf32, #tpu.memory_space<any>>
      %c0_i32_34 = arith.constant 0 : i32
      %c0_i32_35 = arith.constant 0 : i32
      %81 = tpu.memref_slice %arg8[%77, %c0_i32_34, %c0_i32_35] : memref<2x24x128xf32, #tpu.memory_space<vmem>> -> memref<1x24x128xf32, #tpu.memory_space<vmem>>
      %82 = tpu.memref_squeeze %81 : memref<1x24x128xf32, #tpu.memory_space<vmem>> -> memref<24x128xf32, #tpu.memory_space<vmem>>
      %83 = tpu.memref_slice %arg9[%77] : memref<2x!tpu.dma_semaphore, #tpu.memory_space<semaphore_mem>> -> memref<1x!tpu.dma_semaphore, #tpu.memory_space<semaphore_mem>>
      %84 = tpu.memref_squeeze %83 : memref<1x!tpu.dma_semaphore, #tpu.memory_space<semaphore_mem>> -> memref<!tpu.dma_semaphore, #tpu.memory_space<semaphore_mem>>
      tpu.enqueue_dma source(%80 : memref<24x128xf32, #tpu.memory_space<any>>) target(%82 : memref<24x128xf32, #tpu.memory_space<vmem>>) target_semaphore(%84 : memref<!tpu.dma_semaphore, #tpu.memory_space<semaphore_mem>>)
    } else {
    }
    %24 = arith.index_cast %9 : i32 to index
    %c0 = arith.constant 0 : index
    %c0_11 = arith.constant 0 : index
    %25 = vector.load %arg8[%24, %c0, %c0_11] : memref<2x24x128xf32, #tpu.memory_space<vmem>>, vector<1x24x128xf32>
    %26 = vector.shape_cast %25 : vector<1x24x128xf32> to vector<24x128xf32>
    %c8_i32_12 = arith.constant 8 : i32
    %27 = arith.muli %arg1, %c8_i32_12 : i32
    %28 = vector.extract_strided_slice %26 {offsets = [6, 0], sizes = [10, 128], strides = [1, 1]} : vector<24x128xf32> to vector<10x128xf32>
    %29 = vector.extract_strided_slice %26 {offsets = [7, 0], sizes = [10, 128], strides = [1, 1]} : vector<24x128xf32> to vector<10x128xf32>
    %30 = vector.extract_strided_slice %26 {offsets = [8, 0], sizes = [10, 128], strides = [1, 1]} : vector<24x128xf32> to vector<10x128xf32>
    %31 = tpu.concatenate %28, %29, %30 in 1 : vector<10x128xf32>, vector<10x128xf32>, vector<10x128xf32> -> vector<10x384xf32>
    %c0_13 = arith.constant 0 : index
    %c0_14 = arith.constant 0 : index
    %32 = vector.load %arg3[%c0_13, %c0_14] : memref<384x128xf32, #tpu.memory_space<vmem>>, vector<384x128xf32>
    %cst = arith.constant dense<0.000000e+00> : vector<10x128xf32>
    %33 = tpu.matmul %31, %32, %cst {dimension_numbers = #tpu.dot_dimension_numbers<[1], [0], [0], [1], [0, 0, 1, 1], [], []>} : vector<10x384xf32>, vector<384x128xf32>, vector<10x128xf32> -> vector<10x128xf32>
    %c0_15 = arith.constant 0 : index
    %c0_16 = arith.constant 0 : index
    %34 = vector.load %arg4[%c0_15, %c0_16] : memref<1x128xf32, #tpu.memory_space<vmem>>, vector<1x128xf32>
    %35 = vector.broadcast %34 : vector<1x128xf32> to vector<10x128xf32>
    %36 = arith.addf %33, %35 : vector<10x128xf32>
    %37 = arith.negf %36 : vector<10x128xf32>
    %38 = math.exp %37 : vector<10x128xf32>
    %cst_17 = arith.constant 1.000000e+00 : f32
    %39 = vector.broadcast %cst_17 : f32 to vector<10x128xf32>
    %40 = arith.addf %39, %38 : vector<10x128xf32>
    %41 = arith.divf %39, %40 : vector<10x128xf32>
    %42 = arith.mulf %36, %41 : vector<10x128xf32>
    %c1_i32_18 = arith.constant 1 : i32
    %43 = arith.subi %27, %c1_i32_18 : i32
    %44 = tpu.iota {dimensions = array<i32: 0>} : vector<10x1xi32>
    %45 = vector.broadcast %43 : i32 to vector<10x1xi32>
    %46 = arith.addi %45, %44 : vector<10x1xi32>
    %c0_i32_19 = arith.constant 0 : i32
    %47 = vector.broadcast %c0_i32_19 : i32 to vector<10x1xi32>
    %48 = arith.cmpi sge, %46, %47 : vector<10x1xi32>
    %c16_i32 = arith.constant 16 : i32
    %49 = vector.broadcast %c16_i32 : i32 to vector<10x1xi32>
    %50 = arith.cmpi slt, %46, %49 : vector<10x1xi32>
    %51 = arith.andi %48, %50 : vector<10x1xi1>
    %cst_20 = arith.constant 0.000000e+00 : f32
    %52 = vector.shape_cast %51 : vector<10x1xi1> to vector<10x1xi1>
    %53 = vector.broadcast %52 : vector<10x1xi1> to vector<10x128xi1>
    %54 = vector.broadcast %cst_20 : f32 to vector<10x128xf32>
    %55 = arith.select %53, %42, %54 : vector<10x128xi1>, vector<10x128xf32>
    %56 = vector.extract_strided_slice %55 {offsets = [0, 0], sizes = [8, 128], strides = [1, 1]} : vector<10x128xf32> to vector<8x128xf32>
    %57 = vector.extract_strided_slice %55 {offsets = [1, 0], sizes = [8, 128], strides = [1, 1]} : vector<10x128xf32> to vector<8x128xf32>
    %58 = vector.extract_strided_slice %55 {offsets = [2, 0], sizes = [8, 128], strides = [1, 1]} : vector<10x128xf32> to vector<8x128xf32>
    %59 = tpu.concatenate %56, %57, %58 in 1 : vector<8x128xf32>, vector<8x128xf32>, vector<8x128xf32> -> vector<8x384xf32>
    %c0_21 = arith.constant 0 : index
    %c0_22 = arith.constant 0 : index
    %60 = vector.load %arg5[%c0_21, %c0_22] : memref<384x128xf32, #tpu.memory_space<vmem>>, vector<384x128xf32>
    %cst_23 = arith.constant dense<0.000000e+00> : vector<8x128xf32>
    %61 = tpu.matmul %59, %60, %cst_23 {dimension_numbers = #tpu.dot_dimension_numbers<[1], [0], [0], [1], [0, 0, 1, 1], [], []>} : vector<8x384xf32>, vector<384x128xf32>, vector<8x128xf32> -> vector<8x128xf32>
    %c0_24 = arith.constant 0 : index
    %c0_25 = arith.constant 0 : index
    %62 = vector.load %arg6[%c0_24, %c0_25] : memref<1x128xf32, #tpu.memory_space<vmem>>, vector<1x128xf32>
    %63 = vector.broadcast %62 : vector<1x128xf32> to vector<8x128xf32>
    %64 = arith.addf %61, %63 : vector<8x128xf32>
    %65 = arith.negf %64 : vector<8x128xf32>
    %66 = math.exp %65 : vector<8x128xf32>
    %cst_26 = arith.constant 1.000000e+00 : f32
    %67 = vector.broadcast %cst_26 : f32 to vector<8x128xf32>
    %68 = arith.addf %67, %66 : vector<8x128xf32>
    %69 = arith.divf %67, %68 : vector<8x128xf32>
    %70 = arith.mulf %64, %69 : vector<8x128xf32>
    %71 = vector.extract_strided_slice %26 {offsets = [8, 0], sizes = [8, 128], strides = [1, 1]} : vector<24x128xf32> to vector<8x128xf32>
    %72 = arith.addf %70, %71 : vector<8x128xf32>
    %c0_27 = arith.constant 0 : index
    %c0_28 = arith.constant 0 : index
    %c0_29 = arith.constant 0 : index
    %73 = vector.load %arg7[%c0_27, %c0_28, %c0_29] : memref<1x8x128xf32, #tpu.memory_space<vmem>>, vector<1x8x128xf32>
    %74 = vector.shape_cast %73 : vector<1x8x128xf32> to vector<8x128xf32>
    %75 = vector.shape_cast %72 : vector<8x128xf32> to vector<1x8x128xf32>
    tpu.vector_store %arg7[%c0_27, %c0_28, %c0_29], %75 {strides = array<i32>} : memref<1x8x128xf32, #tpu.memory_space<vmem>>, vector<1x8x128xf32>,
    return
  }
  func.func @transform_1(%arg0: i32, %arg1: i32) -> (i32, i32) {
    %c0_i32 = arith.constant 0 : i32
    %c0_i32_0 = arith.constant 0 : i32
    %c0_i32_1 = arith.constant 0 : i32
    return %c0_i32, %c0_i32_0 : i32, i32
  }
  func.func @transform_2(%arg0: i32, %arg1: i32) -> (i32, i32) {
    %c0_i32 = arith.constant 0 : i32
    %c0_i32_0 = arith.constant 0 : i32
    %c0_i32_1 = arith.constant 0 : i32
    return %c0_i32, %c0_i32_0 : i32, i32
  }
  func.func @transform_3(%arg0: i32, %arg1: i32) -> (i32, i32) {
    %c0_i32 = arith.constant 0 : i32
    %c0_i32_0 = arith.constant 0 : i32
    %c0_i32_1 = arith.constant 0 : i32
    return %c0_i32, %c0_i32_0 : i32, i32
  }
  func.func @transform_4(%arg0: i32, %arg1: i32) -> (i32, i32) {
    %c0_i32 = arith.constant 0 : i32
    %c0_i32_0 = arith.constant 0 : i32
    %c0_i32_1 = arith.constant 0 : i32
    return %c0_i32, %c0_i32_0 : i32, i32
  }
  func.func @transform_5(%arg0: i32, %arg1: i32) -> (i32, i32, i32) {
    %c0_i32 = arith.constant 0 : i32
    %c0_i32_0 = arith.constant 0 : i32
    return %arg0, %arg1, %c0_i32 : i32, i32, i32
  }
}

</mosaic_0001>

<llo_original>
// kernel: tpu_custom_call.1
$region0: #{tpu_custom_call.1}
  #allocation0 [shape = 'u32[]', space=smem, size = 0x4, offset = 0x4, fixed_abs, tag = 'smem constant byte address 0x4 - core index']
  #allocation1 [shape = 'u32[144,128]{1,0:T(1,128)}', space=vmem, size = 0x12000, scoped, tag = 'internal scratch']
  #allocation2 [shape = 'f32[2,24,128]{2,1,0:T(8,128)}', space=vmem, size = 0x6000, scoped, tag = 'scratch operand']
  #allocation3 [shape = 's32[2]{0}', space=sflag, size = 0x8, scoped, tag = 'scratch operand']
  #allocation10 [shape = 's32[]', space=sflag, size = 0x4, offset = 0, fixed_abs, tag = 'sflag constant byte address 0x0 - dummy sync flag']
  #allocation11 [shape = 's32[]', space=sflag, size = 0x4, offset = 0, fixed_abs, tag = 'sflag constant byte address 0x0 - dummy sync flag']
  #allocation12 [shape = 'u32[]', space=smem, size = 0x4, offset = 0x44, fixed_abs, tag = 'smem constant byte address 0x44 - assertion arg 0']
  #allocation13 [shape = 'u32[]', space=smem, size = 0x4, offset = 0x48, fixed_abs, tag = 'smem constant byte address 0x48 - assertion arg 1']
  #allocation14 [shape = 's32[]', space=sflag, size = 0x4, offset = 0, fixed_abs, tag = 'sflag constant byte address 0x0 - dummy sync flag']
  #allocation15 [shape = 's32[]', space=sflag, size = 0x4, offset = 0, fixed_abs, tag = 'sflag constant byte address 0x0 - dummy sync flag']
  %s0 = inlined_call_operand.hbm [shape: f32[2,32,128], index: 0, kind: input, shape index: {}]
  %s1 = inlined_call_operand.hbm [shape: f32[384,128], index: 1, kind: input, shape index: {}]
  %s2 = inlined_call_operand.vmem [shape: f32[1,128], index: 2, kind: input, shape index: {}]
  %s3 = inlined_call_operand.hbm [shape: f32[384,128], index: 3, kind: input, shape index: {}]
  %s4 = inlined_call_operand.vmem [shape: f32[1,128], index: 4, kind: input, shape index: {}]
  %s5 = inlined_call_operand.hbm [shape: f32[2,16,128], index: 5, kind: output, shape index: {}]
  %s6 = sld [smem:[#allocation0]]
  $region73: #{tpu_custom_call.1} parent=0
    _
  %s8 = ssub.s32 1, %s6
  %s9 = scalar_select 0, %s8, %s6
  $region1: #{tpu_custom_call.1} parent=0
    #allocation4 [shape = 'u8[196608]{0}', space=vmem, size = 0x30000, scoped, tag = 'input window, operand 1, single buffered']
    #allocation5 [shape = 's32[2]{0}', space=sflag, size = 0x8, scoped, tag = 'scoped memory for tpu_custom_call.1']
    #allocation6 [shape = 's32[2]{0}', space=sflag, size = 0x8, scoped, tag = 'scoped memory for tpu_custom_call.1']
    #allocation7 [shape = 'u8[196608]{0}', space=vmem, size = 0x30000, scoped, tag = 'input window, operand 3, single buffered']
    #allocation8 [shape = 's32[1]{0}', space=sflag, size = 0x4, scoped, tag = 'scoped memory for tpu_custom_call.1']
    #allocation9 [shape = 'u8[8192]{0}', space=vmem, size = 0x2000, scoped, tag = 'output window, operand 0']
    %10 = vsyncpa [#allocation5], 0
    %11 = vsyncpa [#allocation8], 0
    %12 = vsyncpa [#allocation6], 0
    %s13 = scalar_lea.sflag [#allocation6], 1
    %14 = vsyncpa %s13, 0
    loop: start=0, step=1, limit=6
    $region2: #{tpu_custom_call.1} parent=1 // loop_pre_header
      _
    $region3: #{tpu_custom_call.1} parent=1 // loop_header
      %s16 = sphi 0, %s20
      %p17 = scmp.ge.s32.totalorder %s16, 6
      %s23 = sphi 0, %s35
      %s24 = sphi 0, %s31
      %s25 = sphi 0, %s23
      %s26 = sphi 0, %s24
      %s27 = sphi 0, %s25
      %s28 = sphi 0, %s26
      %s36 = sphi 0, %s36
      %s38 = sphi 0, %s36
      %s39 = sphi 0, %s38
      %s53 = sphi 0, %s39
      %s57 = sphi 0, %s57
      %s59 = sphi 0, %s57
      %s60 = sphi 0, %s59
      %s74 = sphi 0, %s60
      %s78 = sphi 0, %s78
      %s80 = sphi 0, %s78
      %s81 = sphi 0, %s80
      %s95 = sphi 0, %s81
      %s99 = sphi 0, %s99
      %s101 = sphi 0, %s99
      %s102 = sphi 0, %s101
      %s116 = sphi 0, %s102
      %s124 = sphi 0, %s126
      %s127 = sphi 0, %s124
      %s128 = sphi 0, %s127
      %s144 = sphi 0, %s128
    $region4: #{tpu_custom_call.1} parent=1 // loop_header_branch
      %19 = sbr.rel (%p17) target = $region8
    $region5: #{tpu_custom_call.1} parent=1 // loop_body
      %s21 = ssub.s32 %s16, 1
      %s22 = ssub.s32 %s16, 2
      %s29 = sadd.s32 1, %s24
      %p30 = scmp.ge.s32.totalorder %s29, 2
      %s31 = scalar_select %p30, 0, %s29
      %s32 = sadd.s32 1, %s23
      %s33 = scalar_select %p30, %s32, %s23
      %p34 = scmp.ge.s32.totalorder %s33, 2
      %s35 = scalar_select %p34, 0, %s33
      %s37 = sadd.s32 %s36, 1
      %p40 = scmp.eq.s32.totalorder %s16, 3
      %p41 = scmp.ne.s32.totalorder %s36, %s38
      %p42 = scmp.eq.s32.totalorder %s16, 0
      %p43 = por %p41, %p42
      %p44 = scmp.ne.s32.totalorder %s36, %s38
      %p45 = scmp.eq.s32.totalorder %s21, 3
      %p46 = por %p44, %p45
      %p47 = scmp.ne.s32.totalorder %s38, %s39
      %p48 = scmp.eq.s32.totalorder %s21, 0
      %p49 = por %p47, %p48
      %p50 = scmp.ne.s32.totalorder %s38, %s39
      %p51 = scmp.eq.s32.totalorder %s22, 3
      %p52 = por %p50, %p51
      %p54 = scmp.ne.s32.totalorder %s39, %s53
      %p55 = scmp.eq.s32.totalorder %s22, 0
      %p56 = por %p54, %p55
      %s58 = sadd.s32 %s57, 1
      %p61 = scmp.eq.s32.totalorder %s16, 3
      %p62 = scmp.ne.s32.totalorder %s57, %s59
      %p63 = scmp.eq.s32.totalorder %s16, 0
      %p64 = por %p62, %p63
      %p65 = scmp.ne.s32.totalorder %s57, %s59
      %p66 = scmp.eq.s32.totalorder %s21, 3
      %p67 = por %p65, %p66
      %p68 = scmp.ne.s32.totalorder %s59, %s60
      %p69 = scmp.eq.s32.totalorder %s21, 0
      %p70 = por %p68, %p69
      %p71 = scmp.ne.s32.totalorder %s59, %s60
      %p72 = scmp.eq.s32.totalorder %s22, 3
      %p73 = por %p71, %p72
      %p75 = scmp.ne.s32.totalorder %s60, %s74
      %p76 = scmp.eq.s32.totalorder %s22, 0
      %p77 = por %p75, %p76
      %s79 = sadd.s32 %s78, 1
      %p82 = scmp.eq.s32.totalorder %s16, 3
      %p83 = scmp.ne.s32.totalorder %s78, %s80
      %p84 = scmp.eq.s32.totalorder %s16, 0
      %p85 = por %p83, %p84
      %p86 = scmp.ne.s32.totalorder %s78, %s80
      %p87 = scmp.eq.s32.totalorder %s21, 3
      %p88 = por %p86, %p87
      %p89 = scmp.ne.s32.totalorder %s80, %s81
      %p90 = scmp.eq.s32.totalorder %s21, 0
      %p91 = por %p89, %p90
      %p92 = scmp.ne.s32.totalorder %s80, %s81
      %p93 = scmp.eq.s32.totalorder %s22, 3
      %p94 = por %p92, %p93
      %p96 = scmp.ne.s32.totalorder %s81, %s95
      %p97 = scmp.eq.s32.totalorder %s22, 0
      %p98 = por %p96, %p97
      %s100 = sadd.s32 %s99, 1
      %p103 = scmp.eq.s32.totalorder %s16, 3
      %p104 = scmp.ne.s32.totalorder %s99, %s101
      %p105 = scmp.eq.s32.totalorder %s16, 0
      %p106 = por %p104, %p105
      %p107 = scmp.ne.s32.totalorder %s99, %s101
      %p108 = scmp.eq.s32.totalorder %s21, 3
      %p109 = por %p107, %p108
      %p110 = scmp.ne.s32.totalorder %s101, %s102
      %p111 = scmp.eq.s32.totalorder %s21, 0
      %p112 = por %p110, %p111
      %p113 = scmp.ne.s32.totalorder %s101, %s102
      %p114 = scmp.eq.s32.totalorder %s22, 3
      %p115 = por %p113, %p114
      %p117 = scmp.ne.s32.totalorder %s102, %s116
      %p118 = scmp.eq.s32.totalorder %s22, 0
      %p119 = por %p117, %p118
      %s120 = ssub.s32 %s23, %s35
      %s121 = ssub.s32 %s24, %s31
      %s122 = sor.u32 %s120, %s121
      %p123 = scmp.eq.s32.totalorder %s122, 0
      %s125 = sadd.s32 %s124, 1
      %s126 = scalar_select %p123, %s124, %s125
      %p129 = pneg %p123
      %p130 = scmp.eq.s32.totalorder %s16, 3
      %p131 = por %p129, %p130
      %p132 = scmp.ne.s32.totalorder %s124, %s127
      %p133 = scmp.eq.s32.totalorder %s16, 0
      %p134 = por %p132, %p133
      %p135 = scmp.ne.s32.totalorder %s124, %s127
      %p136 = scmp.eq.s32.totalorder %s21, 3
      %p137 = por %p135, %p136
      %p138 = scmp.ne.s32.totalorder %s127, %s128
      %p139 = scmp.eq.s32.totalorder %s21, 0
      %p140 = por %p138, %p139
      %p141 = scmp.ne.s32.totalorder %s127, %s128
      %p142 = scmp.eq.s32.totalorder %s22, 3
      %p143 = por %p141, %p142
      %p145 = scmp.ne.s32.totalorder %s128, %s144
      %p146 = scmp.eq.s32.totalorder %s22, 0
      %p147 = por %p145, %p146
      %p148 = scmp.le.s32.totalorder 1, %s16
      %p149 = scmp.lt.s32.totalorder %s16, 5
      %p150 = pnand %p148, %p149
      %p151 = pneg %p150
      // Predicated region
      $region9: #{tpu_custom_call.1} parent=5 // pred_check
        _
      $region10: #{tpu_custom_call.1} parent=5 // pred_check_branch
        %153 = sbr.rel (%p150) target = $region12
      $region11: #{tpu_custom_call.1} parent=5 // pred_region
        %s154 = ssub.s32 %s16, 1
        // Predicated region
        $region13: #{tpu_custom_call.1} parent=11 // pred_check
          %p155 = pneg %p49
        $region14: #{tpu_custom_call.1} parent=11 // pred_check_branch
          %157 = sbr.rel (%p155) target = $region16
        $region15: #{tpu_custom_call.1} parent=11 // pred_region
          %s159 = ssub.s32 6144, 6144
          %160 = vsyncadd [#allocation5], %s159
          %s161 = sshll.u32 [#allocation4], 4
          %s162 = int_to_ptr.vmem [resolvable:$true] %s161
          %167 = dma.hbm_to_vmem [thread:$0]  %s1, 6144, %s162, [#allocation5], 128, 128, 8
        $region16: #{tpu_custom_call.1} parent=11 // pred_fallthru
          _
        // Predicated region
        $region17: #{tpu_custom_call.1} parent=11 // pred_check
          %p168 = pneg %p70
        $region18: #{tpu_custom_call.1} parent=11 // pred_check_branch
          %170 = sbr.rel (%p168) target = $region20
        $region19: #{tpu_custom_call.1} parent=11 // pred_region
          _
        $region20: #{tpu_custom_call.1} parent=11 // pred_fallthru
          _
        // Predicated region
        $region21: #{tpu_custom_call.1} parent=11 // pred_check
          %p171 = pneg %p91
        $region22: #{tpu_custom_call.1} parent=11 // pred_check_branch
          %173 = sbr.rel (%p171) target = $region24
        $region23: #{tpu_custom_call.1} parent=11 // pred_region
          %s175 = ssub.s32 6144, 6144
          %176 = vsyncadd [#allocation8], %s175
          %s177 = sshll.u32 [#allocation7], 4
          %s178 = int_to_ptr.vmem [resolvable:$true] %s177
          %183 = dma.hbm_to_vmem [thread:$0]  %s3, 6144, %s178, [#allocation8], 128, 128, 8
        $region24: #{tpu_custom_call.1} parent=11 // pred_fallthru
          _
        // Predicated region
        $region25: #{tpu_custom_call.1} parent=11 // pred_check
          %p184 = pneg %p112
        $region26: #{tpu_custom_call.1} parent=11 // pred_check_branch
          %186 = sbr.rel (%p184) target = $region28
        $region27: #{tpu_custom_call.1} parent=11 // pred_region
          _
        $region28: #{tpu_custom_call.1} parent=11 // pred_fallthru
          _
      $region12: #{tpu_custom_call.1} parent=5 // pred_fallthru
        _
      %p187 = scmp.lt.s32.totalorder %s16, 4
      // Predicated region
      $region29: #{tpu_custom_call.1} parent=5 // pred_check
        %p188 = pneg %p187
      $region30: #{tpu_custom_call.1} parent=5 // pred_check_branch
        %190 = sbr.rel (%p188) target = $region32
      $region31: #{tpu_custom_call.1} parent=5 // pred_region
        _
      $region32: #{tpu_custom_call.1} parent=5 // pred_fallthru
        _
      %p191 = scmp.le.s32.totalorder 1, %s16
      %p192 = scmp.lt.s32.totalorder %s16, 5
      %p193 = pnand %p191, %p192
      %p194 = pneg %p193
      // Predicated region
      $region33: #{tpu_custom_call.1} parent=5 // pred_check
        _
      $region34: #{tpu_custom_call.1} parent=5 // pred_check_branch
        %196 = sbr.rel (%p193) target = $region36
      $region35: #{tpu_custom_call.1} parent=5 // pred_region
        %s197 = ssub.s32 %s16, 1
        // Predicated region
        $region37: #{tpu_custom_call.1} parent=35 // pred_check
          %p198 = pneg %p49
        $region38: #{tpu_custom_call.1} parent=35 // pred_check_branch
          %200 = sbr.rel (%p198) target = $region40
        $region39: #{tpu_custom_call.1} parent=35 // pred_region
          %201 = dma.done [#allocation5], 6144
        $region40: #{tpu_custom_call.1} parent=35 // pred_fallthru
          _
        // Predicated region
        $region41: #{tpu_custom_call.1} parent=35 // pred_check
          %p202 = pneg %p91
        $region42: #{tpu_custom_call.1} parent=35 // pred_check_branch
          %204 = sbr.rel (%p202) target = $region44
        $region43: #{tpu_custom_call.1} parent=35 // pred_region
          %205 = dma.done [#allocation8], 6144
        $region44: #{tpu_custom_call.1} parent=35 // pred_fallthru
          _
        %p206 = pneg %p49
        %p207 = pneg %p46
        %p208 = pneg %p70
        %p209 = pneg %p67
        %p210 = pneg %p91
        %p211 = pneg %p88
        %p212 = pneg %p112
        %p213 = pneg %p109
        %p214 = pneg %p140
        %p215 = pneg %p137
        %s216 = sand.u32 %s127, 1
        %s217 = scalar_lea.sflag [#allocation6], %s216
        %s218 = sand.u32 %s127, 1
        %s219 = smul.addr %s218, 8
        %s220 = scalar_lea.vmem [#allocation9], %s219
        %p221 = scmp.lt.s32.totalorder %s26, 0
        %s222 = ssub.s32 0, %s26
        %s223 = scalar_select %p221, %s222, %s26
        %s224 = sand.u32 %s223, 1
        %s225 = ssub.s32 0, %s224
        %s226 = scalar_select %p221, %s225, %s224
        %p227 = scmp.ne.s32.totalorder %s226, 0
        %p228 = scmp.lt.s32.totalorder %s226, 0
        %p229 = pnand %p228, %p227
        %p230 = pneg %p229
        %s231 = sadd.s32 %s226, 2
        %s232 = scalar_select %p230, %s231, %s226
        %p233 = scmp.eq.s32.totalorder %s26, 0
        // Predicated region
        $region45: #{tpu_custom_call.1} parent=35 // pred_check
          %p234 = pneg %p233
        $region46: #{tpu_custom_call.1} parent=35 // pred_check_branch
          %236 = sbr.rel (%p234) target = $region48
        $region47: #{tpu_custom_call.1} parent=35 // pred_region
          %s237 = smul.u32 %s25, 32
          %s238 = smul.addr %s237, 16
          %s239 = scalar_lea.hbm %s0, %s238
          // Predicated region
          $region49: #{tpu_custom_call.1} parent=47 // pred_check
            _
          $region50: #{tpu_custom_call.1} parent=47 // pred_check_branch
            %241 = sbr.rel target = $region52
          $region51: #{tpu_custom_call.1} parent=47 // pred_region
            %242 = sst [smem:[#allocation12]] [#allocation11]
            %243 = sst [smem:[#allocation13]] [#allocation10]
          $region52: #{tpu_custom_call.1} parent=47 // pred_fallthru
            _
          %245 = shalt.err (0)
          %s247 = sshll.u32 [#allocation2], 4
          %s248 = int_to_ptr.vmem [resolvable:$true] %s247
          %250 = dma.hbm_to_vmem [thread:$0]  %s239, 384, %s248, [#allocation3]
        $region48: #{tpu_custom_call.1} parent=35 // pred_fallthru
          _
        %s251 = smul.u32 %s26, 8
        %s252 = smul.u32 %s232, 24
        %s253 = scalar_lea.vmem [#allocation2], %s252
        %s254 = scalar_lea.sflag [#allocation3], %s232
        %s255 = smul.u32 24, 1
        %s256 = sshll.u32 %s255, 4
        %257 = dma.done %s254, %s256
        %s258 = sadd.s32 %s26, 1
        %p259 = scmp.lt.s32.totalorder %s258, 2
        // Predicated region
        $region53: #{tpu_custom_call.1} parent=35 // pred_check
          %p260 = pneg %p259
        $region54: #{tpu_custom_call.1} parent=35 // pred_check_branch
          %262 = sbr.rel (%p260) target = $region56
        $region55: #{tpu_custom_call.1} parent=35 // pred_region
          %s263 = ssub.s32 1, %s232
          %s264 = smul.u32 %s258, 8
          %s265 = smul.u32 %s25, 32
          %s266 = sadd.s32 %s264, %s265
          %s267 = smul.addr %s266, 16
          %s268 = scalar_lea.hbm %s0, %s267
          %s269 = smul.u32 %s263, 24
          %s270 = scalar_lea.vmem [#allocation2], %s269
          %s271 = scalar_lea.sflag [#allocation3], %s263
          // Predicated region
          $region57: #{tpu_custom_call.1} parent=55 // pred_check
            _
          $region58: #{tpu_custom_call.1} parent=55 // pred_check_branch
            %273 = sbr.rel target = $region60
          $region59: #{tpu_custom_call.1} parent=55 // pred_region
            %274 = sst [smem:[#allocation12]] [#allocation15]
            %275 = sst [smem:[#allocation13]] [#allocation14]
          $region60: #{tpu_custom_call.1} parent=55 // pred_fallthru
            _
          %277 = shalt.err (0)
          %s279 = sshll.u32 %s270, 4
          %s280 = int_to_ptr.vmem [resolvable:$true] %s279
          %282 = dma.hbm_to_vmem [thread:$0]  %s268, 384, %s280, %s271
        $region56: #{tpu_custom_call.1} parent=35 // pred_fallthru
          _
        %v283 = vld [vmem:[%s253] sm:$0xff]
        %v284 = vld [vmem:[%s253 + $0x8] sm:$0xff]
        %v285 = vld [vmem:[%s253 + $0x10] sm:$0xff]
        %vm289 = vcmask 1046528
        %v290 = vrot.slane %v283, 1
        %v291 = vrot.slane %v284, 1
        %v292 = vsel %vm289, %v290, %v291
        %v293 = vrot.slane %v285, 1
        %v294 = vsel %vm289, %v291, %v293
        %vm295 = vcmask 1045504
        %v296 = vrot.slane %v284, 2
        %v297 = vrot.slane %v285, 2
        %v298 = vsel %vm295, %v296, %v297
        %v299 = vld [vmem:[#allocation4] sm:$0xff]
        %v300 = vld [vmem:[#allocation4 + $0x8] sm:$0xff]
        %v301 = vld [vmem:[#allocation4 + $0x10] sm:$0xff]
        %v302 = vld [vmem:[#allocation4 + $0x18] sm:$0xff]
        %v303 = vld [vmem:[#allocation4 + $0x20] sm:$0xff]
        %v304 = vld [vmem:[#allocation4 + $0x28] sm:$0xff]
        %v305 = vld [vmem:[#allocation4 + $0x30] sm:$0xff]
        %v306 = vld [vmem:[#allocation4 + $0x38] sm:$0xff]
        %v307 = vld [vmem:[#allocation4 + $0x40] sm:$0xff]
        %v308 = vld [vmem:[#allocation4 + $0x48] sm:$0xff]
        %v309 = vld [vmem:[#allocation4 + $0x50] sm:$0xff]
        %v310 = vld [vmem:[#allocation4 + $0x58] sm:$0xff]
        %v311 = vld [vmem:[#allocation4 + $0x60] sm:$0xff]
        %v312 = vld [vmem:[#allocation4 + $0x68] sm:$0xff]
        %v313 = vld [vmem:[#allocation4 + $0x70] sm:$0xff]
        %v314 = vld [vmem:[#allocation4 + $0x78] sm:$0xff]
        %v315 = vld [vmem:[#allocation4 + $0x80] sm:$0xff]
        %v316 = vld [vmem:[#allocation4 + $0x88] sm:$0xff]
        %v317 = vld [vmem:[#allocation4 + $0x90] sm:$0xff]
        %v318 = vld [vmem:[#allocation4 + $0x98] sm:$0xff]
        %v319 = vld [vmem:[#allocation4 + $0xa0] sm:$0xff]
        %v320 = vld [vmem:[#allocation4 + $0xa8] sm:$0xff]
        %v321 = vld [vmem:[#allocation4 + $0xb0] sm:$0xff]
        %v322 = vld [vmem:[#allocation4 + $0xb8] sm:$0xff]
        %v323 = vld [vmem:[#allocation4 + $0xc0] sm:$0xff]
        %v324 = vld [vmem:[#allocation4 + $0xc8] sm:$0xff]
        %v325 = vld [vmem:[#allocation4 + $0xd0] sm:$0xff]
        %v326 = vld [vmem:[#allocation4 + $0xd8] sm:$0xff]
        %v327 = vld [vmem:[#allocation4 + $0xe0] sm:$0xff]
        %v328 = vld [vmem:[#allocation4 + $0xe8] sm:$0xff]
        %v329 = vld [vmem:[#allocation4 + $0xf0] sm:$0xff]
        %v330 = vld [vmem:[#allocation4 + $0xf8] sm:$0xff]
        %v331 = vld [vmem:[#allocation4 + $0x100] sm:$0xff]
        %v332 = vld [vmem:[#allocation4 + $0x108] sm:$0xff]
        %v333 = vld [vmem:[#allocation4 + $0x110] sm:$0xff]
        %v334 = vld [vmem:[#allocation4 + $0x118] sm:$0xff]
        %v335 = vld [vmem:[#allocation4 + $0x120] sm:$0xff]
        %v336 = vld [vmem:[#allocation4 + $0x128] sm:$0xff]
        %v337 = vld [vmem:[#allocation4 + $0x130] sm:$0xff]
        %v338 = vld [vmem:[#allocation4 + $0x138] sm:$0xff]
        %v339 = vld [vmem:[#allocation4 + $0x140] sm:$0xff]
        %v340 = vld [vmem:[#allocation4 + $0x148] sm:$0xff]
        %v341 = vld [vmem:[#allocation4 + $0x150] sm:$0xff]
        %v342 = vld [vmem:[#allocation4 + $0x158] sm:$0xff]
        %v343 = vld [vmem:[#allocation4 + $0x160] sm:$0xff]
        %v344 = vld [vmem:[#allocation4 + $0x168] sm:$0xff]
        %v345 = vld [vmem:[#allocation4 + $0x170] sm:$0xff]
        %v346 = vld [vmem:[#allocation4 + $0x178] sm:$0xff]
        %v347 = vld [vmem:[%s2] sm:$0x1]
        %v349 = vlaneseq
        %v350 = vshrl.u32 %v349, 7
        %v351 = vsub.s32 0, %v350
        %v352 = vrot.slane %v347, %v351
        %vm354 = vcmask 1041408
        %v355 = vrot.slane %v283, 6
        %v356 = vrot.slane %v284, 6
        %v357 = vsel %vm354, %v355, %v356
        %v358 = vrot.slane %v292, 6
        %v359 = vrot.slane %v294, 6
        %v360 = vsel %vm354, %v358, %v359
        %v361 = vrot.slane %v296, 6
        %v362 = vrot.slane %v298, 6
        %v363 = vsel %vm354, %v361, %v362
        %370 = vmatprep.subr.mxu0 0.0
        %371 = vmatpush1.msra.mxu0 %v299
        %372 = vmatprep.subr.mxu0 0.0
        %373 = vmatpush1.msra.mxu0 %v300
        %374 = vmatprep.subr.mxu0 0.0
        %375 = vmatpush1.msra.mxu0 %v301
        %376 = vmatprep.subr.mxu0 0.0
        %377 = vmatpush1.msra.mxu0 %v302
        %378 = vmatprep.subr.mxu0 0.0
        %379 = vmatpush1.msra.mxu0 %v303
        %380 = vmatprep.subr.mxu0 0.0
        %381 = vmatpush1.msra.mxu0 %v304
        %382 = vmatprep.subr.mxu0 0.0
        %383 = vmatpush1.msra.mxu0 %v305
        %384 = vmatprep.subr.mxu0 0.0
        %385 = vmatpush1.msra.mxu0 %v306
        %386 = vmatprep.subr.mxu0 0.0
        %387 = vmatpush1.msra.mxu0 %v307
        %388 = vmatprep.subr.mxu0 0.0
        %389 = vmatpush1.msra.mxu0 %v308
        %390 = vmatprep.subr.mxu0 0.0
        %391 = vmatpush1.msra.mxu0 %v309
        %392 = vmatprep.subr.mxu0 0.0
        %393 = vmatpush1.msra.mxu0 %v310
        %394 = vmatprep.subr.mxu0 0.0
        %395 = vmatpush1.msra.mxu0 %v311
        %396 = vmatprep.subr.mxu0 0.0
        %397 = vmatpush1.msra.mxu0 %v312
        %398 = vmatprep.subr.mxu0 0.0
        %399 = vmatpush1.msra.mxu0 %v313
        %400 = vmatprep.subr.mxu0 0.0
        %401 = vmatpush1.msra.mxu0 %v314
        %402 = vmatprep.subr.mxu0 0.0
        %403 = vmatpush1.msra.mxu0 %v315
        %404 = vmatprep.subr.mxu0 0.0
        %405 = vmatpush1.msra.mxu0 %v316
        %406 = vmatprep.subr.mxu0 0.0
        %407 = vmatpush1.msra.mxu0 %v317
        %408 = vmatprep.subr.mxu0 0.0
        %409 = vmatpush1.msra.mxu0 %v318
        %410 = vmatprep.subr.mxu0 0.0
        %411 = vmatpush1.msra.mxu0 %v319
        %412 = vmatprep.subr.mxu0 0.0
        %413 = vmatpush1.msra.mxu0 %v320
        %414 = vmatprep.subr.mxu0 0.0
        %415 = vmatpush1.msra.mxu0 %v321
        %416 = vmatprep.subr.mxu0 0.0
        %417 = vmatpush1.msra.mxu0 %v322
        %418 = vmatprep.subr.mxu0 0.0
        %419 = vmatpush1.msra.mxu0 %v323
        %420 = vmatprep.subr.mxu0 0.0
        %421 = vmatpush1.msra.mxu0 %v324
        %422 = vmatprep.subr.mxu0 0.0
        %423 = vmatpush1.msra.mxu0 %v325
        %424 = vmatprep.subr.mxu0 0.0
        %425 = vmatpush1.msra.mxu0 %v326
        %426 = vmatprep.subr.mxu0 0.0
        %427 = vmatpush1.msra.mxu0 %v327
        %428 = vmatprep.subr.mxu0 0.0
        %429 = vmatpush1.msra.mxu0 %v328
        %430 = vmatprep.subr.mxu0 0.0
        %431 = vmatpush1.msra.mxu0 %v329
        %432 = vmatprep.subr.mxu0 0.0
        %433 = vmatpush1.msra.mxu0 %v330
        %434 = vmatprep.mubr.f32.mxu0 %v360
        %435 = vmatmul.mubr.f32.gmra.mrb[0].mxu0 %v357
        %v436 = vpop.f32.mrb[0].mxu0
        %v437 = vadd.f32 %v352, %v436
        %v438 = vpop.f32.mrb[0].mxu0
        %439 = vmatprep.mubr.f32.mxu0 %v359
        %440 = vmatmul.mubr.f32.gmra.mrb[0].mxu0 %v356
        %v441 = vpop.f32.mrb[0].mxu0
        %v442 = vadd.f32 %v352, %v441
        %v443 = vpop.f32.mrb[0].mxu0
        %444 = vdwg.mxu0
        %445 = vmatprep.subr.mxu0 0.0
        %446 = vmatpush1.msra.mxu0 %v331
        %447 = vmatprep.subr.mxu0 0.0
        %448 = vmatpush1.msra.mxu0 %v332
        %449 = vmatprep.subr.mxu0 0.0
        %450 = vmatpush1.msra.mxu0 %v333
        %451 = vmatprep.subr.mxu0 0.0
        %452 = vmatpush1.msra.mxu0 %v334
        %453 = vmatprep.subr.mxu0 0.0
        %454 = vmatpush1.msra.mxu0 %v335
        %455 = vmatprep.subr.mxu0 0.0
        %456 = vmatpush1.msra.mxu0 %v336
        %457 = vmatprep.subr.mxu0 0.0
        %458 = vmatpush1.msra.mxu0 %v337
        %459 = vmatprep.subr.mxu0 0.0
        %460 = vmatpush1.msra.mxu0 %v338
        %461 = vmatprep.subr.mxu0 0.0
        %462 = vmatpush1.msra.mxu0 %v339
        %463 = vmatprep.subr.mxu0 0.0
        %464 = vmatpush1.msra.mxu0 %v340
        %465 = vmatprep.subr.mxu0 0.0
        %466 = vmatpush1.msra.mxu0 %v341
        %467 = vmatprep.subr.mxu0 0.0
        %468 = vmatpush1.msra.mxu0 %v342
        %469 = vmatprep.subr.mxu0 0.0
        %470 = vmatpush1.msra.mxu0 %v343
        %471 = vmatprep.subr.mxu0 0.0
        %472 = vmatpush1.msra.mxu0 %v344
        %473 = vmatprep.subr.mxu0 0.0
        %474 = vmatpush1.msra.mxu0 %v345
        %475 = vmatprep.subr.mxu0 0.0
        %476 = vmatpush1.msra.mxu0 %v346
        %477 = vmatprep.subr.mxu0 0.0
        %478 = vmatpush1.msra.mxu0 0.0
        %479 = vmatprep.subr.mxu0 0.0
        %480 = vmatpush1.msra.mxu0 0.0
        %481 = vmatprep.subr.mxu0 0.0
        %482 = vmatpush1.msra.mxu0 0.0
        %483 = vmatprep.subr.mxu0 0.0
        %484 = vmatpush1.msra.mxu0 0.0
        %485 = vmatprep.subr.mxu0 0.0
        %486 = vmatpush1.msra.mxu0 0.0
        %487 = vmatprep.subr.mxu0 0.0
        %488 = vmatpush1.msra.mxu0 0.0
        %489 = vmatprep.subr.mxu0 0.0
        %490 = vmatpush1.msra.mxu0 0.0
        %491 = vmatprep.subr.mxu0 0.0
        %492 = vmatpush1.msra.mxu0 0.0
        %493 = vmatprep.subr.mxu0 0.0
        %494 = vmatpush1.msra.mxu0 0.0
        %495 = vmatprep.subr.mxu0 0.0
        %496 = vmatpush1.msra.mxu0 0.0
        %497 = vmatprep.subr.mxu0 0.0
        %498 = vmatpush1.msra.mxu0 0.0
        %499 = vmatprep.subr.mxu0 0.0
        %500 = vmatpush1.msra.mxu0 0.0
        %501 = vmatprep.subr.mxu0 0.0
        %502 = vmatpush1.msra.mxu0 0.0
        %503 = vmatprep.subr.mxu0 0.0
        %504 = vmatpush1.msra.mxu0 0.0
        %505 = vmatprep.subr.mxu0 0.0
        %506 = vmatpush1.msra.mxu0 0.0
        %507 = vmatprep.subr.mxu0 0.0
        %508 = vmatpush1.msra.mxu0 0.0
        %509 = vmatprep.mubr.f32.mxu0 0.0
        %510 = vmatmul.mubr.f32.gmra.mrb[0].mxu0 %v363
        %v511 = vpop.f32.mrb[0].mxu0
        %v512 = vadd.f32 %v437, %v511
        %v513 = vpop.f32.mrb[0].mxu0
        %514 = vmatprep.mubr.f32.mxu0 0.0
        %515 = vmatmul.mubr.f32.gmra.mrb[0].mxu0 %v362
        %v516 = vpop.f32.mrb[0].mxu0
        %v517 = vadd.f32 %v442, %v516
        %v518 = vpop.f32.mrb[0].mxu0
        %519 = vdwg.mxu0
        %v520 = vxor.u32 %v512, 2147483648
        %v521 = vxor.u32 %v517, 2147483648
        %v522 = vmul.f32 %v520, 1.442695
        %v523 = vpow.pop %v522
        %v524 = vmul.f32 %v521, 1.442695
        %v525 = vpow.pop %v524
        %v526 = vadd.f32 %v523, 1.0
        %v527 = vadd.f32 %v525, 1.0
        %v528 = vrcp.pop %v526
        %v529 = vmul.f32 1.0, %v528
        %v530 = vrcp.pop %v527
        %v531 = vmul.f32 1.0, %v530
        %v532 = vmul.f32 %v512, %v529
        %v533 = vmul.f32 %v517, %v531
        %s534 = ssub.s32 %s251, 1
        %v535 = vlaneseq
        %v536 = vshrl.u32 %v535, 7
        %v537 = vadd.s32 %v536, 8
        %v538 = vstv %s534
        %v539 = vadd.s32 %v538, %v536
        %v540 = vadd.s32 %v538, %v537
        %vm541 = vcmp.ge.s32.totalorder %v539, 0
        %vm542 = vcmp.ge.s32.totalorder %v540, 0
        %vm543 = vcmp.lt.s32.totalorder %v539, 16
        %vm544 = vcmp.lt.s32.totalorder %v540, 16
        %vm545 = vmand %vm541, %vm543
        %vm546 = vmand %vm542, %vm544
        %v547 = vsel %vm545, 1, 0
        %v548 = vsel %vm546, 1, 0
        %vm549 = vcmp.eq.s32.totalorder %v547, 1
        %vm550 = vcmp.eq.s32.totalorder %v548, 1
        %v551 = vsel %vm549, %v532, 0.0
        %v552 = vsel %vm550, %v533, 0.0
        %v555 = vrot.slane %v551, 1
        %v556 = vrot.slane %v552, 1
        %v557 = vsel %vm289, %v555, %v556
        %v559 = vrot.slane %v551, 2
        %v560 = vrot.slane %v552, 2
        %v561 = vsel %vm295, %v559, %v560
        %v563 = vld [vmem:[#allocation7] sm:$0xff]
        %v564 = vld [vmem:[#allocation7 + $0x8] sm:$0xff]
        %v565 = vld [vmem:[#allocation7 + $0x10] sm:$0xff]
        %v566 = vld [vmem:[#allocation7 + $0x18] sm:$0xff]
        %v567 = vld [vmem:[#allocation7 + $0x20] sm:$0xff]
        %v568 = vld [vmem:[#allocation7 + $0x28] sm:$0xff]
        %v569 = vld [vmem:[#allocation7 + $0x30] sm:$0xff]
        %v570 = vld [vmem:[#allocation7 + $0x38] sm:$0xff]
        %v571 = vld [vmem:[#allocation7 + $0x40] sm:$0xff]
        %v572 = vld [vmem:[#allocation7 + $0x48] sm:$0xff]
        %v573 = vld [vmem:[#allocation7 + $0x50] sm:$0xff]
        %v574 = vld [vmem:[#allocation7 + $0x58] sm:$0xff]
        %v575 = vld [vmem:[#allocation7 + $0x60] sm:$0xff]
        %v576 = vld [vmem:[#allocation7 + $0x68] sm:$0xff]
        %v577 = vld [vmem:[#allocation7 + $0x70] sm:$0xff]
        %v578 = vld [vmem:[#allocation7 + $0x78] sm:$0xff]
        %v579 = vld [vmem:[#allocation7 + $0x80] sm:$0xff]
        %v580 = vld [vmem:[#allocation7 + $0x88] sm:$0xff]
        %v581 = vld [vmem:[#allocation7 + $0x90] sm:$0xff]
        %v582 = vld [vmem:[#allocation7 + $0x98] sm:$0xff]
        %v583 = vld [vmem:[#allocation7 + $0xa0] sm:$0xff]
        %v584 = vld [vmem:[#allocation7 + $0xa8] sm:$0xff]
        %v585 = vld [vmem:[#allocation7 + $0xb0] sm:$0xff]
        %v586 = vld [vmem:[#allocation7 + $0xb8] sm:$0xff]
        %v587 = vld [vmem:[#allocation7 + $0xc0] sm:$0xff]
        %v588 = vld [vmem:[#allocation7 + $0xc8] sm:$0xff]
        %v589 = vld [vmem:[#allocation7 + $0xd0] sm:$0xff]
        %v590 = vld [vmem:[#allocation7 + $0xd8] sm:$0xff]
        %v591 = vld [vmem:[#allocation7 + $0xe0] sm:$0xff]
        %v592 = vld [vmem:[#allocation7 + $0xe8] sm:$0xff]
        %v593 = vld [vmem:[#allocation7 + $0xf0] sm:$0xff]
        %v594 = vld [vmem:[#allocation7 + $0xf8] sm:$0xff]
        %v595 = vld [vmem:[#allocation7 + $0x100] sm:$0xff]
        %v596 = vld [vmem:[#allocation7 + $0x108] sm:$0xff]
        %v597 = vld [vmem:[#allocation7 + $0x110] sm:$0xff]
        %v598 = vld [vmem:[#allocation7 + $0x118] sm:$0xff]
        %v599 = vld [vmem:[#allocation7 + $0x120] sm:$0xff]
        %v600 = vld [vmem:[#allocation7 + $0x128] sm:$0xff]
        %v601 = vld [vmem:[#allocation7 + $0x130] sm:$0xff]
        %v602 = vld [vmem:[#allocation7 + $0x138] sm:$0xff]
        %v603 = vld [vmem:[#allocation7 + $0x140] sm:$0xff]
        %v604 = vld [vmem:[#allocation7 + $0x148] sm:$0xff]
        %v605 = vld [vmem:[#allocation7 + $0x150] sm:$0xff]
        %v606 = vld [vmem:[#allocation7 + $0x158] sm:$0xff]
        %v607 = vld [vmem:[#allocation7 + $0x160] sm:$0xff]
        %v608 = vld [vmem:[#allocation7 + $0x168] sm:$0xff]
        %v609 = vld [vmem:[#allocation7 + $0x170] sm:$0xff]
        %v610 = vld [vmem:[#allocation7 + $0x178] sm:$0xff]
        %v611 = vld [vmem:[%s4] sm:$0x1]
        %v613 = vlaneseq
        %v614 = vshrl.u32 %v613, 7
        %v615 = vsub.s32 0, %v614
        %v616 = vrot.slane %v611, %v615
        %618 = vmatprep.subr.mxu0 0.0
        %619 = vmatpush1.msra.mxu0 %v563
        %620 = vmatprep.subr.mxu0 0.0
        %621 = vmatpush1.msra.mxu0 %v564
        %622 = vmatprep.subr.mxu0 0.0
        %623 = vmatpush1.msra.mxu0 %v565
        %624 = vmatprep.subr.mxu0 0.0
        %625 = vmatpush1.msra.mxu0 %v566
        %626 = vmatprep.subr.mxu0 0.0
        %627 = vmatpush1.msra.mxu0 %v567
        %628 = vmatprep.subr.mxu0 0.0
        %629 = vmatpush1.msra.mxu0 %v568
        %630 = vmatprep.subr.mxu0 0.0
        %631 = vmatpush1.msra.mxu0 %v569
        %632 = vmatprep.subr.mxu0 0.0
        %633 = vmatpush1.msra.mxu0 %v570
        %634 = vmatprep.subr.mxu0 0.0
        %635 = vmatpush1.msra.mxu0 %v571
        %636 = vmatprep.subr.mxu0 0.0
        %637 = vmatpush1.msra.mxu0 %v572
        %638 = vmatprep.subr.mxu0 0.0
        %639 = vmatpush1.msra.mxu0 %v573
        %640 = vmatprep.subr.mxu0 0.0
        %641 = vmatpush1.msra.mxu0 %v574
        %642 = vmatprep.subr.mxu0 0.0
        %643 = vmatpush1.msra.mxu0 %v575
        %644 = vmatprep.subr.mxu0 0.0
        %645 = vmatpush1.msra.mxu0 %v576
        %646 = vmatprep.subr.mxu0 0.0
        %647 = vmatpush1.msra.mxu0 %v577
        %648 = vmatprep.subr.mxu0 0.0
        %649 = vmatpush1.msra.mxu0 %v578
        %650 = vmatprep.subr.mxu0 0.0
        %651 = vmatpush1.msra.mxu0 %v579
        %652 = vmatprep.subr.mxu0 0.0
        %653 = vmatpush1.msra.mxu0 %v580
        %654 = vmatprep.subr.mxu0 0.0
        %655 = vmatpush1.msra.mxu0 %v581
        %656 = vmatprep.subr.mxu0 0.0
        %657 = vmatpush1.msra.mxu0 %v582
        %658 = vmatprep.subr.mxu0 0.0
        %659 = vmatpush1.msra.mxu0 %v583
        %660 = vmatprep.subr.mxu0 0.0
        %661 = vmatpush1.msra.mxu0 %v584
        %662 = vmatprep.subr.mxu0 0.0
        %663 = vmatpush1.msra.mxu0 %v585
        %664 = vmatprep.subr.mxu0 0.0
        %665 = vmatpush1.msra.mxu0 %v586
        %666 = vmatprep.subr.mxu0 0.0
        %667 = vmatpush1.msra.mxu0 %v587
        %668 = vmatprep.subr.mxu0 0.0
        %669 = vmatpush1.msra.mxu0 %v588
        %670 = vmatprep.subr.mxu0 0.0
        %671 = vmatpush1.msra.mxu0 %v589
        %672 = vmatprep.subr.mxu0 0.0
        %673 = vmatpush1.msra.mxu0 %v590
        %674 = vmatprep.subr.mxu0 0.0
        %675 = vmatpush1.msra.mxu0 %v591
        %676 = vmatprep.subr.mxu0 0.0
        %677 = vmatpush1.msra.mxu0 %v592
        %678 = vmatprep.subr.mxu0 0.0
        %679 = vmatpush1.msra.mxu0 %v593
        %680 = vmatprep.subr.mxu0 0.0
        %681 = vmatpush1.msra.mxu0 %v594
        %682 = vmatprep.mubr.f32.mxu0 %v557
        %683 = vmatmul.mubr.f32.gmra.mrb[0].mxu0 %v551
        %v684 = vpop.f32.mrb[0].mxu0
        %v685 = vadd.f32 %v616, %v684
        %v686 = vpop.f32.mrb[0].mxu0
        %687 = vdwg.mxu0
        %688 = vmatprep.subr.mxu0 0.0
        %689 = vmatpush1.msra.mxu0 %v595
        %690 = vmatprep.subr.mxu0 0.0
        %691 = vmatpush1.msra.mxu0 %v596
        %692 = vmatprep.subr.mxu0 0.0
        %693 = vmatpush1.msra.mxu0 %v597
        %694 = vmatprep.subr.mxu0 0.0
        %695 = vmatpush1.msra.mxu0 %v598
        %696 = vmatprep.subr.mxu0 0.0
        %697 = vmatpush1.msra.mxu0 %v599
        %698 = vmatprep.subr.mxu0 0.0
        %699 = vmatpush1.msra.mxu0 %v600
        %700 = vmatprep.subr.mxu0 0.0
        %701 = vmatpush1.msra.mxu0 %v601
        %702 = vmatprep.subr.mxu0 0.0
        %703 = vmatpush1.msra.mxu0 %v602
        %704 = vmatprep.subr.mxu0 0.0
        %705 = vmatpush1.msra.mxu0 %v603
        %706 = vmatprep.subr.mxu0 0.0
        %707 = vmatpush1.msra.mxu0 %v604
        %708 = vmatprep.subr.mxu0 0.0
        %709 = vmatpush1.msra.mxu0 %v605
        %710 = vmatprep.subr.mxu0 0.0
        %711 = vmatpush1.msra.mxu0 %v606
        %712 = vmatprep.subr.mxu0 0.0
        %713 = vmatpush1.msra.mxu0 %v607
        %714 = vmatprep.subr.mxu0 0.0
        %715 = vmatpush1.msra.mxu0 %v608
        %716 = vmatprep.subr.mxu0 0.0
        %717 = vmatpush1.msra.mxu0 %v609
        %718 = vmatprep.subr.mxu0 0.0
        %719 = vmatpush1.msra.mxu0 %v610
        %720 = vmatprep.subr.mxu0 0.0
        %721 = vmatpush1.msra.mxu0 0.0
        %722 = vmatprep.subr.mxu0 0.0
        %723 = vmatpush1.msra.mxu0 0.0
        %724 = vmatprep.subr.mxu0 0.0
        %725 = vmatpush1.msra.mxu0 0.0
        %726 = vmatprep.subr.mxu0 0.0
        %727 = vmatpush1.msra.mxu0 0.0
        %728 = vmatprep.subr.mxu0 0.0
        %729 = vmatpush1.msra.mxu0 0.0
        %730 = vmatprep.subr.mxu0 0.0
        %731 = vmatpush1.msra.mxu0 0.0
        %732 = vmatprep.subr.mxu0 0.0
        %733 = vmatpush1.msra.mxu0 0.0
        %734 = vmatprep.subr.mxu0 0.0
        %735 = vmatpush1.msra.mxu0 0.0
        %736 = vmatprep.subr.mxu0 0.0
        %737 = vmatpush1.msra.mxu0 0.0
        %738 = vmatprep.subr.mxu0 0.0
        %739 = vmatpush1.msra.mxu0 0.0
        %740 = vmatprep.subr.mxu0 0.0
        %741 = vmatpush1.msra.mxu0 0.0
        %742 = vmatprep.subr.mxu0 0.0
        %743 = vmatpush1.msra.mxu0 0.0
        %744 = vmatprep.subr.mxu0 0.0
        %745 = vmatpush1.msra.mxu0 0.0
        %746 = vmatprep.subr.mxu0 0.0
        %747 = vmatpush1.msra.mxu0 0.0
        %748 = vmatprep.subr.mxu0 0.0
        %749 = vmatpush1.msra.mxu0 0.0
        %750 = vmatprep.subr.mxu0 0.0
        %751 = vmatpush1.msra.mxu0 0.0
        %752 = vmatprep.mubr.f32.mxu0 0.0
        %753 = vmatmul.mubr.f32.gmra.mrb[0].mxu0 %v561
        %v754 = vpop.f32.mrb[0].mxu0
        %v755 = vadd.f32 %v685, %v754
        %v756 = vpop.f32.mrb[0].mxu0
        %757 = vdwg.mxu0
        %v758 = vxor.u32 %v755, 2147483648
        %v759 = vmul.f32 %v758, 1.442695
        %v760 = vpow.pop %v759
        %v761 = vadd.f32 %v760, 1.0
        %v762 = vrcp.pop %v761
        %v763 = vmul.f32 1.0, %v762
        %v764 = vmul.f32 %v755, %v763
        %v765 = vadd.f32 %v764, %v284
        %766 = vst [vmem:[%s220] sm:$0xff] %v765
        %s767 = sand.u32 %s127, 1
        %s768 = scalar_lea.sflag [#allocation6], %s767
        %s769 = sand.u32 %s127, 1
        %s770 = smul.addr %s769, 8
        %s771 = scalar_lea.vmem [#allocation9], %s770
        // Predicated region
        $region61: #{tpu_custom_call.1} parent=35 // pred_check
          %p772 = pneg %p137
        $region62: #{tpu_custom_call.1} parent=35 // pred_check_branch
          %774 = sbr.rel (%p772) target = $region64
        $region63: #{tpu_custom_call.1} parent=35 // pred_region
          %s776 = ssub.s32 128, 128
          %777 = vsyncadd %s768, %s776
          %s778 = smul.addr %s25, 2
          %s779 = sadd.s32 %s26, %s778
          %s780 = smul.addr %s779, 128
          %s781 = scalar_lea.hbm %s5, %s780
          %s783 = sshll.u32 %s771, 4
          %s784 = int_to_ptr.vmem [resolvable:$true] %s783
          %786 = dma.vmem_to_hbm [thread:$0]  %s784, 128, %s781, %s768
        $region64: #{tpu_custom_call.1} parent=35 // pred_fallthru
          _
      $region36: #{tpu_custom_call.1} parent=5 // pred_fallthru
        _
      %p787 = scmp.le.s32.totalorder 2, %s16
      // Predicated region
      $region65: #{tpu_custom_call.1} parent=5 // pred_check
        %p788 = pneg %p787
      $region66: #{tpu_custom_call.1} parent=5 // pred_check_branch
        %790 = sbr.rel (%p788) target = $region68
      $region67: #{tpu_custom_call.1} parent=5 // pred_region
        %s791 = ssub.s32 %s16, 2
        // Predicated region
        $region69: #{tpu_custom_call.1} parent=67 // pred_check
          %p792 = pneg %p143
        $region70: #{tpu_custom_call.1} parent=67 // pred_check_branch
          %794 = sbr.rel (%p792) target = $region72
        $region71: #{tpu_custom_call.1} parent=67 // pred_region
          %s795 = sand.u32 %s128, 1
          %s796 = scalar_lea.sflag [#allocation6], %s795
          %s797 = sand.u32 %s128, 1
          %s798 = smul.addr %s797, 8
          %s799 = scalar_lea.vmem [#allocation9], %s798
          %800 = dma.done %s796, 128
        $region72: #{tpu_custom_call.1} parent=67 // pred_fallthru
          _
      $region68: #{tpu_custom_call.1} parent=5 // pred_fallthru
        _
    $region6: #{tpu_custom_call.1} parent=1 // loop_footer
      %s20 = sadd.s32 1, %s16
    $region7: #{tpu_custom_call.1} parent=1 // loop_footer_branch
      %15 = sbr.rel target = $region3
    $region8: #{tpu_custom_call.1} parent=1 // loop_exit
      _
    %801 = vsyncpa [#allocation5], 1
    %s802 = scalar_lea.sflag [#allocation5], 1
    %803 = vsyncpa %s802, 1
    %804 = vsyncpa [#allocation8], 1
    %805 = vsyncpa [#allocation6], 1
    %s806 = scalar_lea.sflag [#allocation6], 1
    %807 = vsyncpa %s806, 1
  %808 = vsyncmov [#allocation3]
  %s809 = vpop.sfrf %808
  %p810 = scmp.eq.s32.totalorder %s809, 0
  %p811 = pneg %p810
  %813 = shalt.err (%p811)
  %s814 = scalar_lea.sflag [#allocation3], 1
  %815 = vsyncmov %s814
  %s816 = vpop.sfrf %815
  %p817 = scmp.eq.s32.totalorder %s816, 0
  %p818 = pneg %p817
  %820 = shalt.err (%p818)

</llo_original>
